<compile_context>
chip_gen: v6e
topology: v6e:2x2x1
jax: 0.10.0
libtpu: 0.0.40
codegen_flags: <defaults>
</compile_context>

<pallas_src>
import abc

import jax
import jax.numpy as jnp
from jax.experimental import pallas as pl
from jax.experimental.pallas import tpu as pltpu

_CHUNK_BYTES = 16 * 1024 * 1024   # target bytes per DMA chunk (~16 MiB)
_MAX_CHUNKS = 64                  # bound on statically unrolled DMA issues
_N_OUTSTANDING = 2                # DMA copies kept in flight


def _leading_dim_chunks(shape, itemsize):
    """Static (start, rows) chunks along dim 0 targeting ~_CHUNK_BYTES each.

    Returns [None] when a single whole-array DMA is the right answer
    (scalar / leading dim <= 1 / tiny arrays).
    """
    if len(shape) == 0:
        return [None]
    lead = int(shape[0])
    if lead <= 1:
        return [None]
    slab_bytes = itemsize
    for d in shape[1:]:
        slab_bytes *= int(d)
    slab_bytes = max(1, slab_bytes)
    rows = max(1, _CHUNK_BYTES // slab_bytes)
    if -(-lead // rows) > _MAX_CHUNKS:          # cap unrolled DMA count
        rows = -(-lead // _MAX_CHUNKS)
    chunks = []
    start = 0
    while start < lead:
        size = min(rows, lead - start)
        chunks.append((start, size))
        start += size
    return chunks


def _dma_copy(x):
    """Materialized copy of `x` via direct HBM->HBM DMA (no VMEM staging)."""
    itemsize = jnp.dtype(x.dtype).itemsize
    nbytes = int(x.size) * itemsize
    chunks = _leading_dim_chunks(x.shape, itemsize)
    n_out = min(_N_OUTSTANDING, len(chunks))

    def kernel(x_hbm, o_hbm, sem):
        # Chunked HBM->HBM DMA, up to `n_out` copies in flight.  Chunk bounds
        # are static (trace-time) so this unrolls into plain DMA descriptors.
        copies = []
        for i, c in enumerate(chunks):
            slot = i % n_out
            if i >= n_out:
                copies[i - n_out].wait()        # retire this slot's copy
            if c is None:
                src, dst = x_hbm, o_hbm         # whole-array copy
            else:
                s, sz = c
                src = x_hbm.at[pl.ds(s, sz)]
                dst = o_hbm.at[pl.ds(s, sz)]
            cp = pltpu.make_async_copy(src, dst, sem.at[slot])
            cp.start()
            copies.append(cp)
        for cp in copies[-n_out:]:
            cp.wait()

    return pl.pallas_call(
        kernel,
        out_shape=jax.ShapeDtypeStruct(x.shape, x.dtype),
        in_specs=[pl.BlockSpec(memory_space=pl.ANY)],
        out_specs=pl.BlockSpec(memory_space=pl.ANY),
        scratch_shapes=[pltpu.SemaphoreType.DMA((n_out,))],
        cost_estimate=pl.CostEstimate(
            flops=0, transcendentals=0, bytes_accessed=2 * nbytes),
    )(x)


def extern_node_passthrough(x, *, force_copy: bool = False):
    """Identity forward for an ExternNode input tensor.

    Default: return the input as-is (exact identity, zero HBM traffic).
    force_copy=True: return a *materialized* copy produced by a direct
    HBM->HBM DMA Pallas kernel — works for any shape/dtype, no tiling
    constraints, bounded only by HBM bandwidth.
    """
    if not force_copy:
        return x

    x = jnp.asarray(x)
    if int(x.size) == 0:
        return x                         # nothing to copy
    if x.ndim == 0:
        return _dma_copy(x.reshape(1)).reshape(())
    return _dma_copy(x)


class ExternNodeBase(metaclass=abc.ABCMeta):
    """Mirror of n3's ExternNodeBase plumbing (glue, plain Python)."""

    def __init__(self, args, input, output, values):
        self._node_input = dict(input)
        self._node_output = dict(output)
        for k, v in values.items():
            setattr(self, k.replace(" ", "_"), v)

    @abc.abstractmethod
    def forward(self, **kwargs):
        raise NotImplementedError

    def __repr__(self, depth: int = 0) -> str:
        indent = " " * (depth * 4) + " " * 2
        indent_node = " " * ((depth + 1) * 4)
        name = f"[node extern object {self.__class__.__name__}]"
        inp = f"\n{indent}[input]\n" + "\n".join(
            f"{indent_node}{k}: {repr(v)}" for k, v in self._node_input.items()
        )
        out = f"\n{indent}[output]\n" + "\n".join(
            f"{indent_node}{k}: {repr(v)}" for k, v in self._node_output.items()
        )
        return name + inp + out


class ExternNode(ExternNodeBase, metaclass=abc.ABCMeta):
    """JAX/Pallas counterpart of the PyTorch ExternNode (the nn.Module mixin
    is replaced by plain Python; the module's __init__ defines no params)."""

    def __init__(self, args, input, output, values):
        ExternNodeBase.__init__(self, args, input, output, values)

    @abc.abstractmethod
    def forward(self, **kwargs):
        raise NotImplementedError


class PassthroughExternNode(ExternNode):
    """Minimal concrete node: routes every input tensor through unchanged.

    args={"force_copy": True} materializes each tensor via the HBM->HBM DMA
    kernel; the default is the zero-cost identity path recommended for exact
    pass-through.
    """

    def __init__(self, args, input, output, values):
        super().__init__(args, input, output, values)
        self._force_copy = bool(dict(args).get("force_copy", False))

    def forward(self, **kwargs):
        out = {
            k: extern_node_passthrough(v, force_copy=self._force_copy)
            for k, v in kwargs.items()
        }
        if len(out) == 1:
            return next(iter(out.values()))
        return out


if __name__ == "__main__":
    key = jax.random.PRNGKey(0)
    k1, k2 = jax.random.split(key)
    # NCHW input plus a ragged-size tensor to exercise the constraint-free
    # DMA copy path (previously that case silently aliased the input).
    x = jax.random.normal(k1, (2, 4, 16, 16), dtype=jnp.float32)
    z = jax.random.normal(k2, (3, 5, 7), dtype=jnp.float32)

    # 1) force_copy path: real materialized copies via HBM->HBM DMA.
    node = PassthroughExternNode(
        args={"force_copy": True},
        input={"x": "tensor[2,4,16,16]", "z": "tensor[3,5,7]"},
        output={"x": "tensor[2,4,16,16]", "z": "tensor[3,5,7]"},
        values={"sample value": 1},
    )
    out = node.forward(x=x, z=z)
    y = jax.block_until_ready(out["x"])
    w = jax.block_until_ready(out["z"])
    assert y.shape == x.shape and y.dtype == x.dtype
    assert bool(jnp.array_equal(y, x)), "pass-through (DMA copy) mismatch on x"
    assert w.shape == z.shape and w.dtype == z.dtype
    assert bool(jnp.array_equal(w, z)), "pass-through (DMA copy) mismatch on z"

    # 2) Default zero-copy identity path (the recommended fast path).
    fast_node = PassthroughExternNode(
        args={},
        input={"x": "tensor[2,4,16,16]"},
        output={"x": "tensor[2,4,16,16]"},
        values={"sample value": 1},
    )
    y_fast = jax.block_until_ready(fast_node.forward(x=x))
    assert bool(jnp.array_equal(y_fast, x)), "pass-through (fast path) mismatch"

    assert node.sample_value == 1  # values plumbing check
    print("KERNEL_OK")
</pallas_src>

<mosaic_0001>
module attributes {stable_mosaic.version = 11 : i64} {
  func.func @kernel(%arg0: memref<2x4x16x16xf32, #tpu.memory_space<any>>, %arg1: memref<2x4x16x16xf32, #tpu.memory_space<any>>, %arg2: memref<1x!tpu.dma_semaphore, #tpu.memory_space<semaphore_mem>>) attributes {dimension_semantics = [], scalar_prefetch = 0 : i64, scratch_operands = 1 : i64, tpu.core_type = #tpu.core_type<tc>} {
    %c0_i32 = arith.constant 0 : i32
    %c0_i32_0 = arith.constant 0 : i32
    %c0_i32_1 = arith.constant 0 : i32
    %c0_i32_2 = arith.constant 0 : i32
    %c0_i32_3 = arith.constant 0 : i32
    %0 = tpu.memref_slice %arg0[%c0_i32_0, %c0_i32_1, %c0_i32_2, %c0_i32_3] : memref<2x4x16x16xf32, #tpu.memory_space<any>> -> memref<2x4x16x16xf32, #tpu.memory_space<any>>
    %c0_i32_4 = arith.constant 0 : i32
    %c0_i32_5 = arith.constant 0 : i32
    %c0_i32_6 = arith.constant 0 : i32
    %c0_i32_7 = arith.constant 0 : i32
    %1 = tpu.memref_slice %arg1[%c0_i32_4, %c0_i32_5, %c0_i32_6, %c0_i32_7] : memref<2x4x16x16xf32, #tpu.memory_space<any>> -> memref<2x4x16x16xf32, #tpu.memory_space<any>>
    %2 = tpu.memref_slice %arg2[%c0_i32] : memref<1x!tpu.dma_semaphore, #tpu.memory_space<semaphore_mem>> -> memref<1x!tpu.dma_semaphore, #tpu.memory_space<semaphore_mem>>
    %3 = tpu.memref_squeeze %2 : memref<1x!tpu.dma_semaphore, #tpu.memory_space<semaphore_mem>> -> memref<!tpu.dma_semaphore, #tpu.memory_space<semaphore_mem>>
    tpu.enqueue_dma source(%0 : memref<2x4x16x16xf32, #tpu.memory_space<any>>) target(%1 : memref<2x4x16x16xf32, #tpu.memory_space<any>>) target_semaphore(%3 : memref<!tpu.dma_semaphore, #tpu.memory_space<semaphore_mem>>)
    %c0_i32_8 = arith.constant 0 : i32
    %c0_i32_9 = arith.constant 0 : i32
    %c0_i32_10 = arith.constant 0 : i32
    %c0_i32_11 = arith.constant 0 : i32
    %c0_i32_12 = arith.constant 0 : i32
    %4 = tpu.memref_slice %arg0[%c0_i32_9, %c0_i32_10, %c0_i32_11, %c0_i32_12] : memref<2x4x16x16xf32, #tpu.memory_space<any>> -> memref<2x4x16x16xf32, #tpu.memory_space<any>>
    %c0_i32_13 = arith.constant 0 : i32
    %c0_i32_14 = arith.constant 0 : i32
    %c0_i32_15 = arith.constant 0 : i32
    %c0_i32_16 = arith.constant 0 : i32
    %5 = tpu.memref_slice %arg1[%c0_i32_13, %c0_i32_14, %c0_i32_15, %c0_i32_16] : memref<2x4x16x16xf32, #tpu.memory_space<any>> -> memref<2x4x16x16xf32, #tpu.memory_space<any>>
    %6 = tpu.memref_slice %arg2[%c0_i32_8] : memref<1x!tpu.dma_semaphore, #tpu.memory_space<semaphore_mem>> -> memref<1x!tpu.dma_semaphore, #tpu.memory_space<semaphore_mem>>
    %7 = tpu.memref_squeeze %6 : memref<1x!tpu.dma_semaphore, #tpu.memory_space<semaphore_mem>> -> memref<!tpu.dma_semaphore, #tpu.memory_space<semaphore_mem>>
    tpu.wait_dma2 semaphore(%7 : memref<!tpu.dma_semaphore, #tpu.memory_space<semaphore_mem>>) src(%4 : memref<2x4x16x16xf32, #tpu.memory_space<any>>) dst(%5 : memref<2x4x16x16xf32, #tpu.memory_space<any>>)
    return
  }
}

</mosaic_0001>

<llo_original>
// kernel: tpu_custom_call.1
$region0: #{tpu_custom_call.1}
  #allocation0 [shape = 'u32[]', space=smem, size = 0x4, offset = 0x4, fixed_abs, tag = 'smem constant byte address 0x4 - core index']
  #allocation1 [shape = 'u32[144,128]{1,0:T(1,128)}', space=vmem, size = 0x12000, scoped, tag = 'internal scratch']
  #allocation2 [shape = 's32[1]{0}', space=sflag, size = 0x4, scoped, tag = 'scratch operand']
  #allocation3 [shape = 's32[]', space=sflag, size = 0x4, offset = 0, fixed_abs, tag = 'sflag constant byte address 0x0 - dummy sync flag']
  #allocation4 [shape = 'u32[0]{0}', space=smem, size = 0, offset = 0, fixed_abs, tag = 'smem constant byte address 0x0 - null']
  %s0 = inlined_call_operand.hbm [shape: f32[2,4,16,16], index: 0, kind: input, shape index: {}]
  %s1 = inlined_call_operand.hbm [shape: f32[2,4,16,16], index: 1, kind: output, shape index: {}]
  %s2 = sld [smem:[#allocation0]]
  $region2: #{tpu_custom_call.1} parent=0
    _
  %s4 = ssub.s32 1, %s2
  %s5 = scalar_select 0, %s4, %s2
  %s7 = sshll.u32 1, 14
  %s8 = sxor.u32 4294967295, %s7
  %12 = dma.general %s0, 2048, %s1, [#allocation2], 131072, [#allocation4], 0, 0
  %s13 = smul.u32 2, 4
  %s14 = smul.u32 %s13, 16
  %s15 = smul.u32 %s14, 1
  %s16 = sshll.u32 %s15, 4
  %17 = dma.done [#allocation2], %s16
  %18 = vsyncmov [#allocation2]
  %s19 = vpop.sfrf %18
  %p20 = scmp.eq.s32.totalorder %s19, 0
  %p21 = pneg %p20
  %23 = shalt.err (%p21)

</llo_original>
